<compile_context>
chip_gen: v5e
topology: v5e:2x2
jax: 0.10.0
libtpu: 0.0.40
codegen_flags: <defaults>
</compile_context>

<pallas_src>
import jax
import jax.numpy as jnp
from jax.experimental import pallas as pl
from jax.experimental.pallas import tpu as pltpu


def _validator_kernel(x_ref, wt_ref, b1w2_ref, b2_ref, out_ref):
    """Fused forward of BOTH validators in one pass.

    x_ref    : [B, 3d]  = [control | vo | mo]                         (VMEM)
    wt_ref   : [3d, 4d] merged, pre-transposed, block-sparse W1
               (vo rows feed only the visual columns, mo rows only the
                memory columns; control rows feed both)               (VMEM)
    b1w2_ref : [2, 4d]  row 0 = [b1_vis | b1_mem], row 1 = [w2_vis | w2_mem]
    b2_ref   : [2]      output biases (scalars in SMEM)
    out_ref  : [B, 2]   col 0 = valid_vo, col 1 = valid_mo
    """
    d4 = wt_ref.shape[1]
    d2 = d4 // 2

    # One MXU matmul computes the layer-1 pre-activations of both validators.
    h = (jnp.dot(x_ref[...], wt_ref[...], preferred_element_type=jnp.float32)
         + b1w2_ref[0:1, :])                                      # [B, 4d]

    # ELU(alpha=1): h if h > 0 else exp(h) - 1.
    # exp(min(h,0)) - 1 == expm1(h) to ~1e-7 abs near h==0; plain exp is a
    # guaranteed EUP lowering on v5e/v6e/v7x.
    h = jnp.where(h > 0.0, h, jnp.exp(jnp.minimum(h, 0.0)) - 1.0)

    # Linear(2d -> 1) per validator as VPU multiply + lane (XLU) reduction —
    # keeps the MXU out of a 1-column matmul.
    prod = h * b1w2_ref[1:2, :]                                   # [B, 4d]
    y_vis = jnp.sum(prod[:, :d2], axis=1, keepdims=True) + b2_ref[0]   # [B,1]
    y_mem = jnp.sum(prod[:, d2:], axis=1, keepdims=True) + b2_ref[1]   # [B,1]

    out_ref[:, 0:1] = jax.nn.sigmoid(y_vis)
    out_ref[:, 1:2] = jax.nn.sigmoid(y_mem)


def pack_validator_params(vis_params, mem_params):
    """Pack both validators' parameters ONCE (hoisted out of the forward).

    Call this when parameters are created/updated, not per step.
    PyTorch convention: W has shape [out, in], y = x @ W.T + b.
    """
    w1_v, b1_v, w2_v, b2_v = vis_params
    w1_m, b1_m, w2_m, b2_m = mem_params
    f32 = jnp.float32
    d2 = w1_v.shape[0]
    d = d2 // 2
    z = jnp.zeros((d, d2), f32)
    # y_vis^T-less, batch-major merge:  x = [c | vo | mo]  (shape [B, 3d])
    #   h[:, :2d]  = [c|vo] @ W1_v.T    h[:, 2d:] = [c|mo] @ W1_m.T
    wt_vis = jnp.concatenate([w1_v[:, :d].T, w1_v[:, d:].T, z], axis=0)   # [3d, 2d]
    wt_mem = jnp.concatenate([w1_m[:, :d].T, z, w1_m[:, d:].T], axis=0)   # [3d, 2d]
    wt = jnp.concatenate([wt_vis, wt_mem], axis=1).astype(f32)            # [3d, 4d]
    b1w2 = jnp.stack([jnp.concatenate([b1_v, b1_m]),
                      jnp.concatenate([w2_v[0], w2_m[0]])]).astype(f32)   # [2, 4d]
    b2 = jnp.concatenate([b2_v, b2_m]).astype(f32)                        # [2] -> SMEM
    return wt, b1w2, b2


@jax.jit
def validator_unit_forward(control, vo, mo, packed_params):
    """Pallas equivalent of ValidatorUnit.forward -> (valid_vo, valid_mo), each [B]."""
    wt, b1w2, b2 = packed_params
    B = control.shape[0]
    f32 = jnp.float32

    # Single stacked input operand (replaces the module's two concats and the
    # previous version's three transposes): one HLO op, one DMA descriptor.
    x = jnp.concatenate([control, vo, mo], axis=1).astype(f32)            # [B, 3d]

    vmem = pl.BlockSpec(memory_space=pltpu.MemorySpace.VMEM)
    smem = pl.BlockSpec(memory_space=pltpu.MemorySpace.SMEM)

    out = pl.pallas_call(
        _validator_kernel,
        out_shape=jax.ShapeDtypeStruct((B, 2), f32),
        in_specs=[vmem, vmem, vmem, smem],
        out_specs=vmem,
    )(x, wt, b1w2, b2)

    # TODO(synk): if this runs every VWM step, fuse it into the surrounding
    # network's kernel or batch across timesteps to amortize the launch.
    return out[:, 0], out[:, 1]                                           # each [B]


def init_two_layer_net(key, dim):
    """Params for Sequential(Linear(2d,2d), ELU, Linear(2d,1), Sigmoid).

    PyTorch convention: W has shape [out, in], y = x @ W.T + b.
    """
    d2 = 2 * dim
    k1, k2, k3, k4 = jax.random.split(key, 4)
    bound = 1.0 / jnp.sqrt(d2)
    w1 = jax.random.uniform(k1, (d2, d2), jnp.float32, -bound, bound)
    b1 = jax.random.uniform(k2, (d2,), jnp.float32, -bound, bound)
    w2 = jax.random.uniform(k3, (1, d2), jnp.float32, -bound, bound)
    b2 = jax.random.uniform(k4, (1,), jnp.float32, -bound, bound)
    return w1, b1, w2, b2


def _reference_validator_unit(control, vo, mo, vis_params, mem_params):
    """Pure-JAX reference mirroring the PyTorch module."""
    def mlp(x, w1, b1, w2, b2):
        h = x @ w1.T + b1
        h = jnp.where(h > 0, h, jnp.expm1(jnp.minimum(h, 0.0)))  # ELU(alpha=1)
        return jax.nn.sigmoid(h @ w2.T + b2)[:, 0]
    return (mlp(jnp.concatenate([control, vo], axis=1), *vis_params),
            mlp(jnp.concatenate([control, mo], axis=1), *mem_params))


if __name__ == "__main__":
    B, dim = 2, 32  # batch=2, hidden d=32 -> MLP width 2d=64, merged width 4d=128

    key = jax.random.PRNGKey(0)
    kc, kv, km, kp1, kp2 = jax.random.split(key, 5)

    control = jax.random.normal(kc, (B, dim), jnp.float32)
    vo = jax.random.normal(kv, (B, dim), jnp.float32)
    mo = jax.random.normal(km, (B, dim), jnp.float32)

    vis_params = init_two_layer_net(kp1, dim)
    mem_params = init_two_layer_net(kp2, dim)

    # Pack once (hoisted out of the per-step forward).
    packed = pack_validator_params(vis_params, mem_params)
    packed = jax.block_until_ready(packed)

    valid_vo, valid_mo = validator_unit_forward(control, vo, mo, packed)
    jax.block_until_ready((valid_vo, valid_mo))

    ref_vo, ref_mo = _reference_validator_unit(control, vo, mo,
                                               vis_params, mem_params)
    assert valid_vo.shape == (B,) and valid_mo.shape == (B,)
    assert jnp.allclose(valid_vo, ref_vo, atol=1e-5)
    assert jnp.allclose(valid_mo, ref_mo, atol=1e-5)

    print("KERNEL_OK")
</pallas_src>

<mosaic_0001>
module attributes {stable_mosaic.version = 11 : i64} {
  func.func @_validator_kernel(%arg0: memref<2x96xf32, #tpu.memory_space<vmem>>, %arg1: memref<96x128xf32, #tpu.memory_space<vmem>>, %arg2: memref<2x128xf32, #tpu.memory_space<vmem>>, %arg3: memref<2xf32, #tpu.memory_space<smem>>, %arg4: memref<2x2xf32, #tpu.memory_space<vmem>>) attributes {dimension_semantics = [], scalar_prefetch = 0 : i64, scratch_operands = 0 : i64, tpu.core_type = #tpu.core_type<tc>} {
    %c0 = arith.constant 0 : index
    %c0_0 = arith.constant 0 : index
    %0 = vector.load %arg0[%c0, %c0_0] : memref<2x96xf32, #tpu.memory_space<vmem>>, vector<2x96xf32>
    %c0_1 = arith.constant 0 : index
    %c0_2 = arith.constant 0 : index
    %1 = vector.load %arg1[%c0_1, %c0_2] : memref<96x128xf32, #tpu.memory_space<vmem>>, vector<96x128xf32>
    %cst = arith.constant dense<0.000000e+00> : vector<2x128xf32>
    %2 = tpu.matmul %0, %1, %cst {dimension_numbers = #tpu.dot_dimension_numbers<[1], [0], [0], [1], [0, 0, 1, 1], [], []>} : vector<2x96xf32>, vector<96x128xf32>, vector<2x128xf32> -> vector<2x128xf32>
    %c0_3 = arith.constant 0 : index
    %c0_4 = arith.constant 0 : index
    %3 = vector.load %arg2[%c0_3, %c0_4] : memref<2x128xf32, #tpu.memory_space<vmem>>, vector<1x128xf32>
    %4 = vector.broadcast %3 : vector<1x128xf32> to vector<2x128xf32>
    %5 = arith.addf %2, %4 : vector<2x128xf32>
    %cst_5 = arith.constant 0.000000e+00 : f32
    %6 = vector.broadcast %cst_5 : f32 to vector<2x128xf32>
    %7 = arith.cmpf ogt, %5, %6 : vector<2x128xf32>
    %cst_6 = arith.constant 0.000000e+00 : f32
    %8 = vector.broadcast %cst_6 : f32 to vector<2x128xf32>
    %9 = arith.minimumf %5, %8 : vector<2x128xf32>
    %10 = math.exp %9 : vector<2x128xf32>
    %cst_7 = arith.constant 1.000000e+00 : f32
    %11 = vector.broadcast %cst_7 : f32 to vector<2x128xf32>
    %12 = arith.subf %10, %11 : vector<2x128xf32>
    %13 = arith.select %7, %5, %12 : vector<2x128xi1>, vector<2x128xf32>
    %c1 = arith.constant 1 : index
    %c0_8 = arith.constant 0 : index
    %14 = vector.load %arg2[%c1, %c0_8] : memref<2x128xf32, #tpu.memory_space<vmem>>, vector<1x128xf32>
    %15 = vector.broadcast %14 : vector<1x128xf32> to vector<2x128xf32>
    %16 = arith.mulf %13, %15 : vector<2x128xf32>
    %17 = vector.extract_strided_slice %16 {offsets = [0, 0], sizes = [2, 64], strides = [1, 1]} : vector<2x128xf32> to vector<2x64xf32>
    %cst_9 = arith.constant dense<0.000000e+00> : vector<2xf32>
    %18 = vector.multi_reduction <add>, %17, %cst_9 [1] : vector<2x64xf32> to vector<2xf32>
    %19 = vector.shape_cast %18 : vector<2xf32> to vector<2x1xf32>
    %c0_10 = arith.constant 0 : index
    %20 = memref.load %arg3[%c0_10] : memref<2xf32, #tpu.memory_space<smem>>
    %21 = vector.broadcast %20 : f32 to vector<2x1xf32>
    %22 = arith.addf %19, %21 : vector<2x1xf32>
    %23 = vector.extract_strided_slice %16 {offsets = [0, 64], sizes = [2, 64], strides = [1, 1]} : vector<2x128xf32> to vector<2x64xf32>
    %cst_11 = arith.constant dense<0.000000e+00> : vector<2xf32>
    %24 = vector.multi_reduction <add>, %23, %cst_11 [1] : vector<2x64xf32> to vector<2xf32>
    %25 = vector.shape_cast %24 : vector<2xf32> to vector<2x1xf32>
    %c1_12 = arith.constant 1 : index
    %26 = memref.load %arg3[%c1_12] : memref<2xf32, #tpu.memory_space<smem>>
    %27 = vector.broadcast %26 : f32 to vector<2x1xf32>
    %28 = arith.addf %25, %27 : vector<2x1xf32>
    %29 = arith.negf %22 : vector<2x1xf32>
    %30 = math.exp %29 : vector<2x1xf32>
    %cst_13 = arith.constant 1.000000e+00 : f32
    %31 = vector.broadcast %cst_13 : f32 to vector<2x1xf32>
    %32 = arith.addf %31, %30 : vector<2x1xf32>
    %33 = arith.divf %31, %32 : vector<2x1xf32>
    %c0_14 = arith.constant 0 : index
    %c0_15 = arith.constant 0 : index
    %34 = vector.load %arg4[%c0_14, %c0_15] : memref<2x2xf32, #tpu.memory_space<vmem>>, vector<2x1xf32>
    tpu.vector_store %arg4[%c0_14, %c0_15], %33 {strides = array<i32>} : memref<2x2xf32, #tpu.memory_space<vmem>>, vector<2x1xf32>,
    %35 = arith.negf %28 : vector<2x1xf32>
    %36 = math.exp %35 : vector<2x1xf32>
    %cst_16 = arith.constant 1.000000e+00 : f32
    %37 = vector.broadcast %cst_16 : f32 to vector<2x1xf32>
    %38 = arith.addf %37, %36 : vector<2x1xf32>
    %39 = arith.divf %37, %38 : vector<2x1xf32>
    %c0_17 = arith.constant 0 : index
    %c1_18 = arith.constant 1 : index
    %40 = vector.load %arg4[%c0_17, %c1_18] : memref<2x2xf32, #tpu.memory_space<vmem>>, vector<2x1xf32>
    tpu.vector_store %arg4[%c0_17, %c1_18], %39 {strides = array<i32>} : memref<2x2xf32, #tpu.memory_space<vmem>>, vector<2x1xf32>,
    return
  }
}

</mosaic_0001>

<llo_original>
// kernel: validator_unit_forward.1
$region0: #{validator_unit_forward.1}
  #allocation0 [shape = 'u32[]', space=smem, size = 0x4, offset = 0x4, fixed_abs, tag = 'smem constant byte address 0x4 - core index']
  #allocation1 [shape = 'u32[72,128]{1,0:T(1,128)}', space=vmem, size = 0x9000, scoped, tag = 'internal scratch']
  %s0 = inlined_call_operand.vmem [shape: f32[2,96], index: 0, kind: input, shape index: {}]
  %s1 = inlined_call_operand.hbm [shape: f32[96,128], index: 1, kind: input, shape index: {}]
  %s2 = inlined_call_operand.vmem [shape: f32[2,128], index: 2, kind: input, shape index: {}]
  %s3 = inlined_call_operand.vmem [shape: f32[2], index: 3, kind: input, shape index: {}]
  %s4 = inlined_call_operand.vmem [shape: f32[2,2], index: 4, kind: output, shape index: {}]
  %s5 = sld [smem:[#allocation0]]
  $region34: #{validator_unit_forward.1} parent=0
    _
  %s7 = ssub.s32 1, %s5
  %s8 = scalar_select 0, %s7, %s5
  $region1: #{validator_unit_forward.1} parent=0
    #allocation2 [shape = 'u8[49152]{0}', space=vmem, size = 0xc000, scoped, tag = 'input window, operand 1, single buffered']
    #allocation3 [shape = 's32[1]{0}', space=sflag, size = 0x4, scoped, tag = 'scoped memory for validator_unit_forward.1']
    #allocation4 [shape = 's32[1]{0}', space=sflag, size = 0x4, scoped, tag = 'scoped memory for validator_unit_forward.1']
    #allocation5 [shape = 'u8[512]{0}', space=smem, size = 0x200, scoped, tag = 'input window, operand 3, single buffered']
    %9 = vsyncpa [#allocation3], 0
    %10 = vsyncpa [#allocation4], 0
    // Predicated region
    $region2: #{validator_unit_forward.1} parent=1 // pred_check
      _
    $region3: #{validator_unit_forward.1} parent=1 // pred_check_branch
      %12 = sbr.rel (0) target = $region5
    $region4: #{validator_unit_forward.1} parent=1 // pred_region
      _
    $region5: #{validator_unit_forward.1} parent=1 // pred_fallthru
      _
    // Predicated region
    $region6: #{validator_unit_forward.1} parent=1 // pred_check
      _
    $region7: #{validator_unit_forward.1} parent=1 // pred_check_branch
      %14 = sbr.rel (0) target = $region9
    $region8: #{validator_unit_forward.1} parent=1 // pred_region
      %16 = vsyncadd [#allocation3], 0
      %s17 = sshll.u32 %s1, 4
      %s18 = int_to_ptr.hbm [resolvable:$true] %s17
      %s19 = sshll.u32 [#allocation2], 4
      %s20 = int_to_ptr.vmem [resolvable:$true] %s19
      %25 = dma.hbm_to_vmem [thread:$0]  %s18, 1536, %s20, [#allocation3], 128, 128, 8
    $region9: #{validator_unit_forward.1} parent=1 // pred_fallthru
      _
    // Predicated region
    $region10: #{validator_unit_forward.1} parent=1 // pred_check
      _
    $region11: #{validator_unit_forward.1} parent=1 // pred_check_branch
      %27 = sbr.rel (0) target = $region13
    $region12: #{validator_unit_forward.1} parent=1 // pred_region
      _
    $region13: #{validator_unit_forward.1} parent=1 // pred_fallthru
      _
    // Predicated region
    $region14: #{validator_unit_forward.1} parent=1 // pred_check
      _
    $region15: #{validator_unit_forward.1} parent=1 // pred_check_branch
      %29 = sbr.rel (0) target = $region17
    $region16: #{validator_unit_forward.1} parent=1 // pred_region
      %31 = vsyncadd [#allocation4], 0
      %s33 = sshll.u32 %s3, 4
      %s34 = int_to_ptr.vmem [resolvable:$true] %s33
      %36 = dma.vmem_to_smem %s34, 16, [#allocation5], [#allocation4]
    $region17: #{validator_unit_forward.1} parent=1 // pred_fallthru
      _
    // Predicated region
    $region18: #{validator_unit_forward.1} parent=1 // pred_check
      _
    $region19: #{validator_unit_forward.1} parent=1 // pred_check_branch
      %38 = sbr.rel (0) target = $region21
    $region20: #{validator_unit_forward.1} parent=1 // pred_region
      %40 = dma.done [#allocation3], 1536
    $region21: #{validator_unit_forward.1} parent=1 // pred_fallthru
      _
    // Predicated region
    $region22: #{validator_unit_forward.1} parent=1 // pred_check
      _
    $region23: #{validator_unit_forward.1} parent=1 // pred_check_branch
      %42 = sbr.rel (0) target = $region25
    $region24: #{validator_unit_forward.1} parent=1 // pred_region
      %44 = dma.done [#allocation4], 16
    $region25: #{validator_unit_forward.1} parent=1 // pred_fallthru
      _
    %45 = sfence
    %v46 = vld [vmem:[%s0] sm:$0x3]
    %v47 = vld [vmem:[#allocation2] sm:$0xff]
    %v48 = vld [vmem:[#allocation2 + $0x8] sm:$0xff]
    %v49 = vld [vmem:[#allocation2 + $0x10] sm:$0xff]
    %v50 = vld [vmem:[#allocation2 + $0x18] sm:$0xff]
    %v51 = vld [vmem:[#allocation2 + $0x20] sm:$0xff]
    %v52 = vld [vmem:[#allocation2 + $0x28] sm:$0xff]
    %v53 = vld [vmem:[#allocation2 + $0x30] sm:$0xff]
    %v54 = vld [vmem:[#allocation2 + $0x38] sm:$0xff]
    %v55 = vld [vmem:[#allocation2 + $0x40] sm:$0xff]
    %v56 = vld [vmem:[#allocation2 + $0x48] sm:$0xff]
    %v57 = vld [vmem:[#allocation2 + $0x50] sm:$0xff]
    %v58 = vld [vmem:[#allocation2 + $0x58] sm:$0xff]
    %v59 = vld [vmem:[%s2] sm:$0x1]
    %v60 = vperm.slane %v59, 0
    %vm61 = vcmask 785408
    %v63 = vsel %vm61, %v46, 0
    %65 = vmatpush.msra.mxu0 0.0
    %66 = vmatpush.msra.mxu0 0.0
    %67 = vmatpush.msra.mxu0 0.0
    %68 = vmatpush.msra.mxu0 0.0
    %69 = vmatpush.msra.mxu0 %v58
    %70 = vmatpush.msra.mxu0 %v57
    %71 = vmatpush.msra.mxu0 %v56
    %72 = vmatpush.msra.mxu0 %v55
    %73 = vmatpush.msra.mxu0 %v54
    %74 = vmatpush.msra.mxu0 %v53
    %75 = vmatpush.msra.mxu0 %v52
    %76 = vmatpush.msra.mxu0 %v51
    %77 = vmatpush.msra.mxu0 %v50
    %78 = vmatpush.msra.mxu0 %v49
    %79 = vmatpush.msra.mxu0 %v48
    %80 = vmatpush.msra.mxu0 %v47
    %81 = vmatmul.f32.gmra.mxu0 %v63
    %v82 = vpop.f32.mrf.mxu0
    %v83 = vadd.f32 %v60, %v82
    %84 = vdwg.mxu0
    %vm85 = vcmp.gt.f32.partialorder %v83, 0.0
    %v86 = vmin.f32 %v83, 0.0
    %v87 = vmul.f32 %v86, 1.442695
    %v88 = vpow.pop %v87
    %v89 = vsub.f32 %v88, 1.0
    %v90 = vsel %vm85, %v83, %v89
    %v91 = vld [vmem:[%s2 + $0x1] sm:$0x1]
    %v92 = vperm.slane %v91, 0
    %v93 = vmul.f32 %v90, %v92
    %vm94 = vcmask 517120
    %v95 = vsel %vm94, %v93, 0.0
    %96 = vadd.xlane.f32.xlu0 %v95
    %v97 = vpop.xlane.xlu0 %96
    %s98 = sld [smem:[#allocation5]]
    %v99 = vstv %s98
    %v100 = vadd.f32 %v97, %v99
    %102 = vrot.lane.b32.xlu0 %v93, 64
    %v103 = vpop.permute.xlu0 %102
    %v105 = vsel %vm94, %v103, 0.0
    %106 = vadd.xlane.f32.xlu0 %v105
    %v107 = vpop.xlane.xlu0 %106
    %s108 = sld [smem:[#allocation5 + $0x1]]
    %v109 = vstv %s108
    %v110 = vadd.f32 %v107, %v109
    %v111 = vxor.u32 %v100, 2147483648
    %v112 = vmul.f32 %v111, 1.442695
    %v113 = vpow.pop %v112
    %v114 = vadd.f32 %v113, 1.0
    %v115 = vrcp.pop %v114
    %v116 = vmul.f32 %v114, %v115
    %v117 = vsub.f32 1.0, %v116
    %v118 = vmul.f32 %v115, %v117
    %v119 = vadd.f32 %v115, %v118
    %vm120 = vweird.f32 %v114
    %vm121 = vweird.f32 %v115
    %vm122 = vmor %vm120, %vm121
    %v123 = vsel %vm122, %v115, %v119
    %v124 = vand.u32 2147483647, %v114
    %vm125 = vcmp.eq.f32.partialorder %v124, 8.507059e+37
    %v126 = vand.u32 %v114, 2147483648
    %v127 = vor.u32 1.1754944e-38, %v126
    %v128 = vsel %vm125, %v127, %v123
    %v129 = vmul.f32 1.0, %v128
    %vm130 = vcmask 1024
    %131 = vst.msk [vmem:[%s4] sm:$0x3] %vm130, %v129
    %v132 = vxor.u32 %v110, 2147483648
    %v133 = vmul.f32 %v132, 1.442695
    %v134 = vpow.pop %v133
    %v135 = vadd.f32 %v134, 1.0
    %v136 = vrcp.pop %v135
    %v137 = vmul.f32 %v135, %v136
    %v138 = vsub.f32 1.0, %v137
    %v139 = vmul.f32 %v136, %v138
    %v140 = vadd.f32 %v136, %v139
    %vm141 = vweird.f32 %v135
    %vm142 = vweird.f32 %v136
    %vm143 = vmor %vm141, %vm142
    %v144 = vsel %vm143, %v136, %v140
    %v145 = vand.u32 2147483647, %v135
    %vm146 = vcmp.eq.f32.partialorder %v145, 8.507059e+37
    %v147 = vand.u32 %v135, 2147483648
    %v148 = vor.u32 1.1754944e-38, %v147
    %v149 = vsel %vm146, %v148, %v144
    %v150 = vmul.f32 1.0, %v149
    %vm151 = vcmask 9224
    %152 = vst.msk [vmem:[%s4] sm:$0x3] %vm151, %v150
    // Predicated region
    $region26: #{validator_unit_forward.1} parent=1 // pred_check
      _
    $region27: #{validator_unit_forward.1} parent=1 // pred_check_branch
      %154 = sbr.rel (0) target = $region29
    $region28: #{validator_unit_forward.1} parent=1 // pred_region
      _
    $region29: #{validator_unit_forward.1} parent=1 // pred_fallthru
      _
    // Predicated region
    $region30: #{validator_unit_forward.1} parent=1 // pred_check
      _
    $region31: #{validator_unit_forward.1} parent=1 // pred_check_branch
      %156 = sbr.rel (0) target = $region33
    $region32: #{validator_unit_forward.1} parent=1 // pred_region
      _
    $region33: #{validator_unit_forward.1} parent=1 // pred_fallthru
      _
    %157 = vsyncpa [#allocation3], 1
    %158 = vsyncpa [#allocation4], 1

</llo_original>
